<compile_context>
chip_gen: v5e
topology: v5e:2x2
jax: 0.10.0
libtpu: 0.0.40
codegen_flags: <defaults>
</compile_context>

<pallas_src>
import jax
import jax.numpy as jnp
from jax import lax
from jax.experimental import pallas as pl
from jax.experimental.pallas import tpu as pltpu


def _patch_embed_kernel(x_ref, w_ref, b_ref, o_ref):
    # x_ref: (K, TN)  bf16 patch columns for this (batch, n-tile) grid step
    # w_ref: (E, K)   bf16 projection weight (resident across the grid)
    # b_ref: (E, 1)   f32 bias (resident across the grid)
    # o_ref: (E, TN)  projected patch embeddings (lane-dense output block)
    acc = jnp.dot(w_ref[...], x_ref[...], preferred_element_type=jnp.float32)
    acc = acc + b_ref[...]                      # f32 bias, broadcast over TN
    o_ref[...] = acc.astype(o_ref.dtype)


def patch_embed(x, weight, bias, patch_size, *, tile_n=1024,
                compute_dtype=jnp.bfloat16):
    """Pallas PatchEmbed forward (norm_layer=None, as in the module default).

    Args:
      x:      (B, C, H, W)  NCHW input (PyTorch convention).
      weight: (E, C, p, p)  Conv2d weight (PyTorch convention).
      bias:   (E,)          Conv2d bias.
      patch_size: int p (kernel_size == stride == p).
      tile_n: N-tile (columns of patches) per grid step; multiple of 128 or N.
      compute_dtype: matmul input dtype (bf16 halves HBM traffic; acc is f32).
    Returns:
      (B, E, H//p, W//p)  NCHW conv output, dtype == x.dtype.
    """
    B, C, H, W = x.shape
    E = weight.shape[0]
    p = patch_size
    if H % p != 0 or W % p != 0:
        raise ValueError("H and W must be divisible by patch_size "
                         "(PyTorch PatchEmbed assumes this too).")
    Hp, Wp = H // p, W // p
    N = Hp * Wp
    K = C * p * p

    # --- glue: patchify, K-major so the kernel output is already "NCHW" -----
    # (B, C, Hp, p, Wp, p) -> (B, C, p, p, Hp, Wp) -> (B, K, N)
    # XLA fuses this transpose with the bf16 cast (single extra input pass).
    # TODO(synk): keep activations channels/patch-major upstream so this
    # becomes a pure reshape and the extra input pass disappears entirely.
    xr = x.reshape(B, C, Hp, p, Wp, p)
    x_t = jnp.transpose(xr, (0, 1, 3, 5, 2, 4)).reshape(B, K, N)
    x_t = x_t.astype(compute_dtype)

    # Conv2d weight (E, C, p, p) -> (E, K); bias -> (E, 1) f32.
    w_mat = weight.reshape(E, K).astype(compute_dtype)
    b_mat = bias.reshape(E, 1).astype(jnp.float32)

    # Fixed, resolution-independent N-tile (multiple of 128, or all of N).
    TN = N if N <= tile_n else tile_n
    grid = (B, pl.cdiv(N, TN))

    out_dtype = x.dtype
    cost = pl.CostEstimate(
        flops=2 * B * E * K * N,
        transcendentals=0,
        bytes_accessed=(x_t.size * x_t.dtype.itemsize
                        + w_mat.size * w_mat.dtype.itemsize
                        + b_mat.size * b_mat.dtype.itemsize
                        + B * E * N * jnp.dtype(out_dtype).itemsize),
    )

    out = pl.pallas_call(
        _patch_embed_kernel,
        out_shape=jax.ShapeDtypeStruct((B, E, N), out_dtype),
        grid_spec=pltpu.PrefetchScalarGridSpec(
            num_scalar_prefetch=0,
            grid=grid,
            in_specs=[
                # batch dim squeezed (None) -> kernel sees (K, TN)
                pl.BlockSpec((None, K, TN), lambda b, n: (b, 0, n)),
                # weight / bias: constant index maps -> resident in VMEM
                pl.BlockSpec((E, K), lambda b, n: (0, 0)),
                pl.BlockSpec((E, 1), lambda b, n: (0, 0)),
            ],
            out_specs=pl.BlockSpec((None, E, TN), lambda b, n: (b, 0, n)),
        ),
        compiler_params=pltpu.CompilerParams(
            # Both grid axes index independent output blocks.
            dimension_semantics=("parallel", "parallel"),
            # Per-step blocks are small (a few MiB double-buffered even for
            # large images); 32 MiB gives ample headroom on v5e/v6e and stays
            # well under v7x's 64 MiB physical VMEM.
            vmem_limit_bytes=32 * 1024 * 1024,
        ),
        cost_estimate=cost,
    )(x_t, w_mat, b_mat)

    # (B, E, N) -> (B, E, Hp, Wp): pure reshape, no transpose pass needed.
    # norm_layer is None in the module default -> no norm applied.
    # TODO(synk): if a norm_layer were supplied, add a normalization pass over
    # the embed dim here (the module's default construction never sets one).
    return out.reshape(B, E, Hp, Wp)


if __name__ == "__main__":
    # Small shapes consistent with the module: img_size=16, patch_size=4,
    # in_channels=4, embed_dim=32, batch=2.
    B, C, H, W = 2, 4, 16, 16
    p = 4
    E = 32

    key = jax.random.PRNGKey(0)
    kx, kw, kb = jax.random.split(key, 3)
    x = jax.random.normal(kx, (B, C, H, W), dtype=jnp.float32)
    weight = 0.02 * jax.random.normal(kw, (E, C, p, p), dtype=jnp.float32)
    bias = 0.01 * jax.random.normal(kb, (E,), dtype=jnp.float32)

    out = patch_embed(x, weight, bias, p)
    out = jax.block_until_ready(out)
    assert out.shape == (B, E, H // p, W // p)

    # Reference: strided conv on the same bf16-rounded inputs (the kernel
    # computes bf16 x bf16 products with f32 accumulation).
    x_q = x.astype(jnp.bfloat16).astype(jnp.float32)
    w_q = weight.astype(jnp.bfloat16).astype(jnp.float32)
    ref = lax.conv_general_dilated(
        x_q, w_q, window_strides=(p, p), padding="VALID",
        dimension_numbers=("NCHW", "OIHW", "NCHW"),
    ) + bias.reshape(1, E, 1, 1)
    assert jnp.allclose(out, ref, atol=2e-3, rtol=2e-3), (
        float(jnp.max(jnp.abs(out - ref))))

    print("KERNEL_OK")
</pallas_src>

<mosaic_0001>
module attributes {stable_mosaic.version = 11 : i64} {
  func.func @_patch_embed_kernel(%arg0: i32, %arg1: i32, %arg2: memref<1x64x16xbf16, #tpu.memory_space<vmem>>, %arg3: memref<32x64xbf16, #tpu.memory_space<vmem>>, %arg4: memref<32x1xf32, #tpu.memory_space<vmem>>, %arg5: memref<1x32x16xf32, #tpu.memory_space<vmem>>) attributes {dimension_semantics = [#tpu.dimension_semantics<parallel>, #tpu.dimension_semantics<parallel>], iteration_bounds = array<i64: 2, 1>, scalar_prefetch = 0 : i64, scratch_operands = 0 : i64, tpu.core_type = #tpu.core_type<tc>, window_params = [{transform_indices = @transform_0, window_bounds = array<i64: 1, 64, 16>}, {pipeline_mode = #tpu.pipeline_mode<synchronous>, transform_indices = @transform_1, window_bounds = array<i64: 32, 64>}, {pipeline_mode = #tpu.pipeline_mode<synchronous>, transform_indices = @transform_2, window_bounds = array<i64: 32, 1>}, {transform_indices = @transform_3, window_bounds = array<i64: 1, 32, 16>}]} {
    %c0 = arith.constant 0 : index
    %c0_0 = arith.constant 0 : index
    %0 = vector.load %arg3[%c0, %c0_0] : memref<32x64xbf16, #tpu.memory_space<vmem>>, vector<32x64xbf16>
    %c0_1 = arith.constant 0 : index
    %c0_2 = arith.constant 0 : index
    %c0_3 = arith.constant 0 : index
    %1 = vector.load %arg2[%c0_1, %c0_2, %c0_3] : memref<1x64x16xbf16, #tpu.memory_space<vmem>>, vector<1x64x16xbf16>
    %2 = vector.shape_cast %1 : vector<1x64x16xbf16> to vector<64x16xbf16>
    %cst = arith.constant dense<0.000000e+00> : vector<32x16xf32>
    %3 = tpu.matmul %0, %2, %cst {dimension_numbers = #tpu.dot_dimension_numbers<[1], [0], [0], [1], [0, 0, 1, 1], [], []>} : vector<32x64xbf16>, vector<64x16xbf16>, vector<32x16xf32> -> vector<32x16xf32>
    %c0_4 = arith.constant 0 : index
    %c0_5 = arith.constant 0 : index
    %4 = vector.load %arg4[%c0_4, %c0_5] : memref<32x1xf32, #tpu.memory_space<vmem>>, vector<32x1xf32>
    %5 = vector.broadcast %4 : vector<32x1xf32> to vector<32x16xf32>
    %6 = arith.addf %3, %5 : vector<32x16xf32>
    %c0_6 = arith.constant 0 : index
    %c0_7 = arith.constant 0 : index
    %c0_8 = arith.constant 0 : index
    %7 = vector.load %arg5[%c0_6, %c0_7, %c0_8] : memref<1x32x16xf32, #tpu.memory_space<vmem>>, vector<1x32x16xf32>
    %8 = vector.shape_cast %7 : vector<1x32x16xf32> to vector<32x16xf32>
    %9 = vector.shape_cast %6 : vector<32x16xf32> to vector<1x32x16xf32>
    tpu.vector_store %arg5[%c0_6, %c0_7, %c0_8], %9 {strides = array<i32>} : memref<1x32x16xf32, #tpu.memory_space<vmem>>, vector<1x32x16xf32>,
    return
  }
  func.func @transform_0(%arg0: i32, %arg1: i32) -> (i32, i32, i32) {
    %c0_i32 = arith.constant 0 : i32
    %c0_i32_0 = arith.constant 0 : i32
    return %arg0, %c0_i32, %arg1 : i32, i32, i32
  }
  func.func @transform_1(%arg0: i32, %arg1: i32) -> (i32, i32) {
    %c0_i32 = arith.constant 0 : i32
    %c0_i32_0 = arith.constant 0 : i32
    %c0_i32_1 = arith.constant 0 : i32
    return %c0_i32, %c0_i32_0 : i32, i32
  }
  func.func @transform_2(%arg0: i32, %arg1: i32) -> (i32, i32) {
    %c0_i32 = arith.constant 0 : i32
    %c0_i32_0 = arith.constant 0 : i32
    %c0_i32_1 = arith.constant 0 : i32
    return %c0_i32, %c0_i32_0 : i32, i32
  }
  func.func @transform_3(%arg0: i32, %arg1: i32) -> (i32, i32, i32) {
    %c0_i32 = arith.constant 0 : i32
    %c0_i32_0 = arith.constant 0 : i32
    return %arg0, %c0_i32, %arg1 : i32, i32, i32
  }
}

</mosaic_0001>

<llo_original>
// kernel: tpu_custom_call.1
$region0: #{tpu_custom_call.1}
  #allocation0 [shape = 'u32[]', space=smem, size = 0x4, offset = 0x4, fixed_abs, tag = 'smem constant byte address 0x4 - core index']
  #allocation1 [shape = 'u32[72,128]{1,0:T(1,128)}', space=vmem, size = 0x9000, scoped, tag = 'internal scratch']
  %s0 = inlined_call_operand.vmem [shape: bf16[2,64,16], index: 0, kind: input, shape index: {}]
  %s1 = inlined_call_operand.vmem [shape: bf16[32,64], index: 1, kind: input, shape index: {}]
  %s2 = inlined_call_operand.vmem [shape: f32[32,1], index: 2, kind: input, shape index: {}]
  %s3 = inlined_call_operand.vmem [shape: f32[2,32,16], index: 3, kind: output, shape index: {}]
  %s4 = sld [smem:[#allocation0]]
  $region45: #{tpu_custom_call.1} parent=0
    _
  %s6 = ssub.s32 1, %s4
  %s7 = scalar_select 0, %s6, %s4
  loop: start=0, step=1, limit=4
  $region2: #{tpu_custom_call.1} parent=0 // loop_pre_header
    _
  $region3: #{tpu_custom_call.1} parent=0 // loop_header
    %s9 = sphi 0, %s13
    %p10 = scmp.ge.s32.totalorder %s9, 4
    %s16 = sphi 0, %s28
    %s17 = sphi 0, %s24
    %s18 = sphi 0, %s16
    %s19 = sphi 0, %s17
    %s20 = sphi 0, %s18
    %s21 = sphi 0, %s19
    %s33 = sphi 0, %s35
    %s36 = sphi 0, %s33
    %s37 = sphi 0, %s36
    %s53 = sphi 0, %s37
    %s57 = sphi 0, %s57
    %s59 = sphi 0, %s57
    %s60 = sphi 0, %s59
    %s74 = sphi 0, %s60
    %s78 = sphi 0, %s78
    %s80 = sphi 0, %s78
    %s81 = sphi 0, %s80
    %s95 = sphi 0, %s81
    %s103 = sphi 0, %s105
    %s106 = sphi 0, %s103
    %s107 = sphi 0, %s106
    %s123 = sphi 0, %s107
  $region4: #{tpu_custom_call.1} parent=0 // loop_header_branch
    %12 = sbr.rel (%p10) target = $region8
  $region5: #{tpu_custom_call.1} parent=0 // loop_body
    %s14 = ssub.s32 %s9, 1
    %s15 = ssub.s32 %s9, 2
    %s22 = sadd.s32 1, %s17
    %p23 = scmp.ge.s32.totalorder %s22, 1
    %s24 = scalar_select %p23, 0, %s22
    %s25 = sadd.s32 1, %s16
    %s26 = scalar_select %p23, %s25, %s16
    %p27 = scmp.ge.s32.totalorder %s26, 2
    %s28 = scalar_select %p27, 0, %s26
    %s29 = ssub.s32 %s16, %s28
    %s30 = ssub.s32 %s17, %s24
    %s31 = sor.u32 %s29, %s30
    %p32 = scmp.eq.s32.totalorder %s31, 0
    %s34 = sadd.s32 %s33, 1
    %s35 = scalar_select %p32, %s33, %s34
    %p38 = pneg %p32
    %p39 = scmp.eq.s32.totalorder %s9, 1
    %p40 = por %p38, %p39
    %p41 = scmp.ne.s32.totalorder %s33, %s36
    %p42 = scmp.eq.s32.totalorder %s9, 0
    %p43 = por %p41, %p42
    %p44 = scmp.ne.s32.totalorder %s33, %s36
    %p45 = scmp.eq.s32.totalorder %s14, 1
    %p46 = por %p44, %p45
    %p47 = scmp.ne.s32.totalorder %s36, %s37
    %p48 = scmp.eq.s32.totalorder %s14, 0
    %p49 = por %p47, %p48
    %p50 = scmp.ne.s32.totalorder %s36, %s37
    %p51 = scmp.eq.s32.totalorder %s15, 1
    %p52 = por %p50, %p51
    %p54 = scmp.ne.s32.totalorder %s37, %s53
    %p55 = scmp.eq.s32.totalorder %s15, 0
    %p56 = por %p54, %p55
    %s58 = sadd.s32 %s57, 1
    %p61 = scmp.eq.s32.totalorder %s9, 1
    %p62 = scmp.ne.s32.totalorder %s57, %s59
    %p63 = scmp.eq.s32.totalorder %s9, 0
    %p64 = por %p62, %p63
    %p65 = scmp.ne.s32.totalorder %s57, %s59
    %p66 = scmp.eq.s32.totalorder %s14, 1
    %p67 = por %p65, %p66
    %p68 = scmp.ne.s32.totalorder %s59, %s60
    %p69 = scmp.eq.s32.totalorder %s14, 0
    %p70 = por %p68, %p69
    %p71 = scmp.ne.s32.totalorder %s59, %s60
    %p72 = scmp.eq.s32.totalorder %s15, 1
    %p73 = por %p71, %p72
    %p75 = scmp.ne.s32.totalorder %s60, %s74
    %p76 = scmp.eq.s32.totalorder %s15, 0
    %p77 = por %p75, %p76
    %s79 = sadd.s32 %s78, 1
    %p82 = scmp.eq.s32.totalorder %s9, 1
    %p83 = scmp.ne.s32.totalorder %s78, %s80
    %p84 = scmp.eq.s32.totalorder %s9, 0
    %p85 = por %p83, %p84
    %p86 = scmp.ne.s32.totalorder %s78, %s80
    %p87 = scmp.eq.s32.totalorder %s14, 1
    %p88 = por %p86, %p87
    %p89 = scmp.ne.s32.totalorder %s80, %s81
    %p90 = scmp.eq.s32.totalorder %s14, 0
    %p91 = por %p89, %p90
    %p92 = scmp.ne.s32.totalorder %s80, %s81
    %p93 = scmp.eq.s32.totalorder %s15, 1
    %p94 = por %p92, %p93
    %p96 = scmp.ne.s32.totalorder %s81, %s95
    %p97 = scmp.eq.s32.totalorder %s15, 0
    %p98 = por %p96, %p97
    %s99 = ssub.s32 %s16, %s28
    %s100 = ssub.s32 %s17, %s24
    %s101 = sor.u32 %s99, %s100
    %p102 = scmp.eq.s32.totalorder %s101, 0
    %s104 = sadd.s32 %s103, 1
    %s105 = scalar_select %p102, %s103, %s104
    %p108 = pneg %p102
    %p109 = scmp.eq.s32.totalorder %s9, 1
    %p110 = por %p108, %p109
    %p111 = scmp.ne.s32.totalorder %s103, %s106
    %p112 = scmp.eq.s32.totalorder %s9, 0
    %p113 = por %p111, %p112
    %p114 = scmp.ne.s32.totalorder %s103, %s106
    %p115 = scmp.eq.s32.totalorder %s14, 1
    %p116 = por %p114, %p115
    %p117 = scmp.ne.s32.totalorder %s106, %s107
    %p118 = scmp.eq.s32.totalorder %s14, 0
    %p119 = por %p117, %p118
    %p120 = scmp.ne.s32.totalorder %s106, %s107
    %p121 = scmp.eq.s32.totalorder %s15, 1
    %p122 = por %p120, %p121
    %p124 = scmp.ne.s32.totalorder %s107, %s123
    %p125 = scmp.eq.s32.totalorder %s15, 0
    %p126 = por %p124, %p125
    %p127 = scmp.le.s32.totalorder 1, %s9
    %p128 = scmp.lt.s32.totalorder %s9, 3
    %p129 = pnand %p127, %p128
    %p130 = pneg %p129
    // Predicated region
    $region9: #{tpu_custom_call.1} parent=5 // pred_check
      _
    $region10: #{tpu_custom_call.1} parent=5 // pred_check_branch
      %132 = sbr.rel (%p129) target = $region12
    $region11: #{tpu_custom_call.1} parent=5 // pred_region
      %s133 = ssub.s32 %s9, 1
      // Predicated region
      $region13: #{tpu_custom_call.1} parent=11 // pred_check
        %p134 = pneg %p70
      $region14: #{tpu_custom_call.1} parent=11 // pred_check_branch
        %136 = sbr.rel (%p134) target = $region16
      $region15: #{tpu_custom_call.1} parent=11 // pred_region
        _
      $region16: #{tpu_custom_call.1} parent=11 // pred_fallthru
        _
      // Predicated region
      $region17: #{tpu_custom_call.1} parent=11 // pred_check
        %p137 = pneg %p91
      $region18: #{tpu_custom_call.1} parent=11 // pred_check_branch
        %139 = sbr.rel (%p137) target = $region20
      $region19: #{tpu_custom_call.1} parent=11 // pred_region
        _
      $region20: #{tpu_custom_call.1} parent=11 // pred_fallthru
        _
    $region12: #{tpu_custom_call.1} parent=5 // pred_fallthru
      _
    %p140 = scmp.lt.s32.totalorder %s9, 2
    // Predicated region
    $region21: #{tpu_custom_call.1} parent=5 // pred_check
      %p141 = pneg %p140
    $region22: #{tpu_custom_call.1} parent=5 // pred_check_branch
      %143 = sbr.rel (%p141) target = $region24
    $region23: #{tpu_custom_call.1} parent=5 // pred_region
      // Predicated region
      $region25: #{tpu_custom_call.1} parent=23 // pred_check
        %p144 = pneg %p43
      $region26: #{tpu_custom_call.1} parent=23 // pred_check_branch
        %146 = sbr.rel (%p144) target = $region28
      $region27: #{tpu_custom_call.1} parent=23 // pred_region
        %p147 = scmp.lt.s32.totalorder %s16, 1
        %s148 = scalar_select %p147, %s16, 1
        %p149 = scmp.lt.s32.totalorder %s17, 0
        %s150 = scalar_select %p149, %s17, 0
        %s151 = smul.addr %s148, 8
        %s152 = sadd.s32 %s150, %s151
        %s153 = smul.addr %s152, 4
        %s154 = scalar_lea.vmem %s0, %s153
      $region28: #{tpu_custom_call.1} parent=23 // pred_fallthru
        _
    $region24: #{tpu_custom_call.1} parent=5 // pred_fallthru
      _
    %p155 = scmp.le.s32.totalorder 1, %s9
    %p156 = scmp.lt.s32.totalorder %s9, 3
    %p157 = pnand %p155, %p156
    %p158 = pneg %p157
    // Predicated region
    $region29: #{tpu_custom_call.1} parent=5 // pred_check
      _
    $region30: #{tpu_custom_call.1} parent=5 // pred_check_branch
      %160 = sbr.rel (%p157) target = $region32
    $region31: #{tpu_custom_call.1} parent=5 // pred_region
      %s161 = ssub.s32 %s9, 1
      %p162 = scmp.lt.s32.totalorder %s18, 1
      %s163 = scalar_select %p162, %s18, 1
      %p164 = scmp.lt.s32.totalorder %s19, 0
      %s165 = scalar_select %p164, %s19, 0
      %s166 = smul.addr %s163, 8
      %s167 = sadd.s32 %s165, %s166
      %s168 = smul.addr %s167, 4
      %s169 = scalar_lea.vmem %s0, %s168
      %p170 = pneg %p49
      %p171 = pneg %p46
      %p172 = pneg %p70
      %p173 = pneg %p67
      %p174 = pneg %p91
      %p175 = pneg %p88
      %p176 = pneg %p119
      %p177 = pneg %p116
      %p178 = scmp.lt.s32.totalorder %s18, 1
      %s179 = scalar_select %p178, %s18, 1
      %p180 = scmp.lt.s32.totalorder %s19, 0
      %s181 = scalar_select %p180, %s19, 0
      %s182 = smul.addr %s179, 4
      %s183 = sadd.s32 %s181, %s182
      %s184 = smul.addr %s183, 8
      %s185 = scalar_lea.vmem %s3, %s184
      %p186 = scmp.lt.s32.totalorder %s18, 1
      %s187 = scalar_select %p186, %s18, 1
      %p188 = scmp.lt.s32.totalorder %s19, 0
      %s189 = scalar_select %p188, %s19, 0
      %s190 = smul.addr %s187, 8
      %s191 = sadd.s32 %s189, %s190
      %s192 = smul.addr %s191, 4
      %s193 = scalar_lea.vmem %s0, %s192
      %p194 = scmp.lt.s32.totalorder %s18, 1
      %s195 = scalar_select %p194, %s18, 1
      %p196 = scmp.lt.s32.totalorder %s19, 0
      %s197 = scalar_select %p196, %s19, 0
      %s198 = smul.addr %s195, 4
      %s199 = sadd.s32 %s197, %s198
      %s200 = smul.addr %s199, 8
      %s201 = scalar_lea.vmem %s3, %s200
      %v203 = vld [vmem:[%s1] sm:$0xf]
      %v204 = vld [vmem:[%s1 + $0x4] sm:$0xf]
      %v205 = vld [vmem:[%s1 + $0x8] sm:$0xf]
      %v206 = vld [vmem:[%s1 + $0xc] sm:$0xf]
      %v207 = vld [vmem:[%s193] sm:$0xf]
      %v208 = vld [vmem:[%s193 + $0x4] sm:$0xf]
      %v209 = vld [vmem:[%s193 + $0x8] sm:$0xf]
      %v210 = vld [vmem:[%s193 + $0xc] sm:$0xf]
      %v211 = vld [vmem:[%s193 + $0x10] sm:$0xf]
      %v212 = vld [vmem:[%s193 + $0x14] sm:$0xf]
      %v213 = vld [vmem:[%s193 + $0x18] sm:$0xf]
      %v214 = vld [vmem:[%s193 + $0x1c] sm:$0xf]
      %v215 = vld [vmem:[%s2] sm:$0xff]
      %v216 = vld [vmem:[%s2 + $0x8] sm:$0xff]
      %v217 = vld [vmem:[%s2 + $0x10] sm:$0xff]
      %v218 = vld [vmem:[%s2 + $0x18] sm:$0xff]
      %220 = vset.pattern.permute.xlu0 0
      %221 = vperm.xlu0 %220, %v215
      %v222 = vpop.permute.xlu0 %221
      %225 = vset.pattern.permute.xlu0 0
      %226 = vperm.xlu0 %225, %v216
      %v227 = vpop.permute.xlu0 %226
      %230 = vset.pattern.permute.xlu0 0
      %231 = vperm.xlu0 %230, %v217
      %v232 = vpop.permute.xlu0 %231
      %235 = vset.pattern.permute.xlu0 0
      %236 = vperm.xlu0 %235, %v218
      %v237 = vpop.permute.xlu0 %236
      %v243 = vunpack.c.l.b16 %v203
      %v244 = vunpack.c.l.b16 %v204
      %v245 = vunpack.c.l.b16 %v205
      %v246 = vunpack.c.l.b16 %v206
      %v247 = vpack.c.b16 %v244, %v243
      %v248 = vpack.c.b16 %v246, %v245
      %v257 = vunpack.c.l.b16 %v207
      %v258 = vunpack.c.l.b16 %v208
      %v259 = vunpack.c.l.b16 %v209
      %v260 = vunpack.c.l.b16 %v210
      %v261 = vunpack.c.l.b16 %v211
      %v262 = vunpack.c.l.b16 %v212
      %v263 = vunpack.c.l.b16 %v213
      %v264 = vunpack.c.l.b16 %v214
      %v265 = vpack.c.b16 %v258, %v257
      %v266 = vpack.c.b16 %v260, %v259
      %v267 = vpack.c.b16 %v262, %v261
      %v268 = vpack.c.b16 %v264, %v263
      %vm273 = vcmask 523264
      %v275 = vsel %vm273, %v247, 0
      %v278 = vsel %vm273, %v248, 0
      %280 = vmatpush.bf16.msra.mxu0 0
      %281 = vmatpush.bf16.msra.mxu0 0
      %282 = vmatpush.bf16.msra.mxu0 0
      %283 = vmatpush.bf16.msra.mxu0 0
      %284 = vmatpush.bf16.msra.mxu0 %v268
      %285 = vmatpush.bf16.msra.mxu0 %v267
      %286 = vmatpush.bf16.msra.mxu0 %v266
      %287 = vmatpush.bf16.msra.mxu0 %v265
      %288 = vmatmul.bf16.gmra.mxu0 %v275
      %v289 = vpop.f32.mrf.mxu0
      %v290 = vadd.f32 %v222, %v289
      %v291 = vpop.f32.mrf.mxu0
      %v292 = vadd.f32 %v227, %v291
      %293 = vmatmul.bf16.gmra.mxu0 %v278
      %v294 = vpop.f32.mrf.mxu0
      %v295 = vadd.f32 %v232, %v294
      %v296 = vpop.f32.mrf.mxu0
      %v297 = vadd.f32 %v237, %v296
      %298 = vdwg.mxu0
      %vm299 = vcmask 130048
      %300 = vst.msk [vmem:[%s201] sm:$0xff] %vm299, %v290
      %301 = vst.msk [vmem:[%s201 + $0x8] sm:$0xff] %vm299, %v292
      %302 = vst.msk [vmem:[%s201 + $0x10] sm:$0xff] %vm299, %v295
      %303 = vst.msk [vmem:[%s201 + $0x18] sm:$0xff] %vm299, %v297
      %p304 = scmp.lt.s32.totalorder %s18, 1
      %s305 = scalar_select %p304, %s18, 1
      %p306 = scmp.lt.s32.totalorder %s19, 0
      %s307 = scalar_select %p306, %s19, 0
      %s308 = smul.addr %s305, 4
      %s309 = sadd.s32 %s307, %s308
      %s310 = smul.addr %s309, 8
      %s311 = scalar_lea.vmem %s3, %s310
      // Predicated region
      $region33: #{tpu_custom_call.1} parent=31 // pred_check
        %p312 = pneg %p116
      $region34: #{tpu_custom_call.1} parent=31 // pred_check_branch
        %314 = sbr.rel (%p312) target = $region36
      $region35: #{tpu_custom_call.1} parent=31 // pred_region
        _
      $region36: #{tpu_custom_call.1} parent=31 // pred_fallthru
        _
    $region32: #{tpu_custom_call.1} parent=5 // pred_fallthru
      _
    %p315 = scmp.le.s32.totalorder 2, %s9
    // Predicated region
    $region37: #{tpu_custom_call.1} parent=5 // pred_check
      %p316 = pneg %p315
    $region38: #{tpu_custom_call.1} parent=5 // pred_check_branch
      %318 = sbr.rel (%p316) target = $region40
    $region39: #{tpu_custom_call.1} parent=5 // pred_region
      %s319 = ssub.s32 %s9, 2
      // Predicated region
      $region41: #{tpu_custom_call.1} parent=39 // pred_check
        %p320 = pneg %p122
      $region42: #{tpu_custom_call.1} parent=39 // pred_check_branch
        %322 = sbr.rel (%p320) target = $region44
      $region43: #{tpu_custom_call.1} parent=39 // pred_region
        %p323 = scmp.lt.s32.totalorder %s20, 1
        %s324 = scalar_select %p323, %s20, 1
        %p325 = scmp.lt.s32.totalorder %s21, 0
        %s326 = scalar_select %p325, %s21, 0
        %s327 = smul.addr %s324, 4
        %s328 = sadd.s32 %s326, %s327
        %s329 = smul.addr %s328, 8
        %s330 = scalar_lea.vmem %s3, %s329
      $region44: #{tpu_custom_call.1} parent=39 // pred_fallthru
        _
    $region40: #{tpu_custom_call.1} parent=5 // pred_fallthru
      _
  $region6: #{tpu_custom_call.1} parent=0 // loop_footer
    %s13 = sadd.s32 1, %s9
  $region7: #{tpu_custom_call.1} parent=0 // loop_footer_branch
    %8 = sbr.rel target = $region3
  $region8: #{tpu_custom_call.1} parent=0 // loop_exit
    _

</llo_original>
